<compile_context>
chip_gen: v7x
topology: tpu7x:2x2x1
jax: 0.10.0
libtpu: 0.0.40
codegen_flags: <defaults>
</compile_context>

<pallas_src>
import functools

import jax
import jax.numpy as jnp
from jax.experimental import pallas as pl
from jax.experimental.pallas import tpu as pltpu

_LANE = 128
_SUBLANE = 8
_TARGET_BLOCK_BYTES = 2 * 1024 * 1024  # per-input block target (double-buffered by Pallas)
_MAX_TM = 8192                         # absolute row cap (keeps f32 intermediates bounded)


def _rmse_partial_kernel(yhat_ref, y_ref, out_ref, *, tm, rows, bps):
    """Accumulate per-split partial sums of (yhat - y)^2 into an (8,128) block."""
    s = pl.program_id(0)   # split (parallel across TensorCores on multi-TC chips)
    i = pl.program_id(1)   # reduction step within the split

    @pl.when(i == 0)
    def _():
        out_ref[...] = jnp.zeros_like(out_ref)

    # Logical (unclamped) block index -> how many rows of this block are valid.
    # The index_map clamps out-of-range logical blocks onto the last real block,
    # so a fully-duplicated block simply gets valid_rows <= 0 and contributes 0.
    row_start = (s * bps + i) * tm
    valid_rows = rows - row_start          # may be <= 0 (duplicate) or >= tm (full)
    needs_mask = valid_rows < tm

    # Fast path: full block, no iota/compare/select on the VPU.
    @pl.when(jnp.logical_not(needs_mask))
    def _():
        d = yhat_ref[...].astype(jnp.float32) - y_ref[...].astype(jnp.float32)
        partial = (d * d).reshape(tm // _SUBLANE, _SUBLANE, _LANE).sum(axis=0)
        out_ref[...] += partial[None, :, :]

    # Slow path: last partial block / clamped duplicate. Must stay a select
    # (NOT a multiply-by-mask) so NaN/inf garbage in Pallas edge blocks cannot
    # propagate into the accumulator.
    @pl.when(needs_mask)
    def _():
        d = yhat_ref[...].astype(jnp.float32) - y_ref[...].astype(jnp.float32)
        row_ids = jax.lax.broadcasted_iota(jnp.int32, (tm, _LANE), 0)
        d2 = jnp.where(row_ids < valid_rows, d * d, 0.0)
        partial = d2.reshape(tm // _SUBLANE, _SUBLANE, _LANE).sum(axis=0)
        out_ref[...] += partial[None, :, :]


def rmse_pallas(yhat, y, eps=1e-6):
    """sqrt(mean((yhat - y)^2) + eps) == torch.sqrt(MSELoss()(yhat, y) + eps)."""
    assert yhat.shape == y.shape, "yhat and y must have the same shape"
    n = int(yhat.size)
    assert n > 0, "RMSE of an empty tensor is undefined"

    inv_n = jnp.float32(1.0 / n)   # host double -> one rounding; exact-ish for huge n
    eps32 = jnp.float32(eps)

    # Flatten (free reshape) keeping the native dtype; upcast happens in-kernel.
    flat_a = yhat.reshape(-1)
    flat_b = y.reshape(-1)

    rem = n % _LANE
    n_aligned = n - rem
    rows = n_aligned // _LANE

    # Tiny inputs: a kernel launch is pure overhead.
    if rows < _SUBLANE:
        d = yhat.astype(jnp.float32) - y.astype(jnp.float32)
        return jnp.sqrt(jnp.sum(d * d) * inv_n + eps32)

    tail_sq = None
    if rem:
        # Ragged tail (< 128 elements): tiny plain-JAX reduction in the wrapper.
        ta = flat_a[n_aligned:].astype(jnp.float32)
        tb = flat_b[n_aligned:].astype(jnp.float32)
        tail_sq = jnp.sum((ta - tb) ** 2)
        # TODO(synk): XLA still materializes this aligned-prefix slice (one copy)
        # for the rare numel % 128 != 0 case; numel % 128 == 0 is fully zero-copy.
        flat_a = flat_a[:n_aligned]
        flat_b = flat_b[:n_aligned]

    a2 = flat_a.reshape(rows, _LANE)
    b2 = flat_b.reshape(rows, _LANE)

    # Dtype-adaptive row tile: ~2 MiB per input block regardless of dtype.
    itemsize_a = jnp.dtype(yhat.dtype).itemsize
    itemsize_b = jnp.dtype(y.dtype).itemsize
    max_tm = min(_MAX_TM, _TARGET_BLOCK_BYTES // (_LANE * max(itemsize_a, itemsize_b)))
    tm = min(max_tm, (rows // _SUBLANE) * _SUBLANE)   # multiple of 8, >= 8

    nblocks = pl.cdiv(rows, tm)
    nsplit = 2 if nblocks >= 4 else 1   # megacore split only when there's real overlap
    bps = pl.cdiv(nblocks, nsplit)      # blocks per split

    def block_index(s, i):
        # Clamp so the DMA never walks past the array; the kernel masks the
        # (at most one) duplicated block to exactly zero.
        return (jnp.minimum(s * bps + i, nblocks - 1), 0)

    kernel = functools.partial(_rmse_partial_kernel, tm=tm, rows=rows, bps=bps)

    cost = pl.CostEstimate(
        flops=3 * n_aligned,                                   # sub, mul, add per element
        transcendentals=0,
        bytes_accessed=n_aligned * (itemsize_a + itemsize_b)
        + nsplit * _SUBLANE * _LANE * 4,
    )

    partials = pl.pallas_call(
        kernel,
        out_shape=jax.ShapeDtypeStruct((nsplit, _SUBLANE, _LANE), jnp.float32),
        grid_spec=pltpu.PrefetchScalarGridSpec(
            num_scalar_prefetch=0,
            grid=(nsplit, bps),
            in_specs=[
                pl.BlockSpec((tm, _LANE), block_index),
                pl.BlockSpec((tm, _LANE), block_index),
            ],
            out_specs=pl.BlockSpec((1, _SUBLANE, _LANE), lambda s, i: (s, 0, 0)),
        ),
        compiler_params=pltpu.CompilerParams(
            dimension_semantics=("parallel", "arbitrary"),
            vmem_limit_bytes=32 * 1024 * 1024,
        ),
        cost_estimate=cost,
    )(a2, b2)

    # Tiny finalize on (nsplit, 8, 128) partials: one cross-lane reduce + sqrt.
    total = jnp.sum(partials)
    if tail_sq is not None:
        total = total + tail_sq
    return jnp.sqrt(total * inv_n + eps32)


def _ref_rmse(yhat, y, eps=1e-6):
    d = yhat.astype(jnp.float32) - y.astype(jnp.float32)
    return jnp.sqrt(jnp.mean(d * d) + jnp.float32(eps))


if __name__ == "__main__":
    key = jax.random.PRNGKey(0)
    k1, k2, k3, k4, k5, k6 = jax.random.split(key, 6)

    # Primary case: small NCHW regression output (aligned, single-block fast path).
    yhat = jax.random.normal(k1, (2, 4, 16, 16), dtype=jnp.float32)
    y = jax.random.normal(k2, (2, 4, 16, 16), dtype=jnp.float32)
    loss = rmse_pallas(yhat, y, eps=1e-6)
    jax.block_until_ready(loss)
    ref = _ref_rmse(yhat, y, eps=1e-6)
    assert jnp.allclose(loss, ref, atol=1e-5, rtol=1e-5), (loss, ref)

    # bf16 inputs with rows not a multiple of the tile -> masked slow path + upcast.
    yhat_b = jax.random.normal(k3, (5, 512), dtype=jnp.bfloat16)
    y_b = jax.random.normal(k4, (5, 512), dtype=jnp.bfloat16)
    loss_b = rmse_pallas(yhat_b, y_b, eps=1e-6)
    jax.block_until_ready(loss_b)
    ref_b = _ref_rmse(yhat_b, y_b, eps=1e-6)
    assert jnp.allclose(loss_b, ref_b, atol=1e-4, rtol=1e-4), (loss_b, ref_b)

    # Ragged numel (n % 128 != 0) -> plain-JAX tail + kernel on the aligned prefix.
    yhat_r = jax.random.normal(k5, (17, 130), dtype=jnp.float32)
    y_r = jax.random.normal(k6, (17, 130), dtype=jnp.float32)
    loss_r = rmse_pallas(yhat_r, y_r, eps=1e-6)
    jax.block_until_ready(loss_r)
    ref_r = _ref_rmse(yhat_r, y_r, eps=1e-6)
    assert jnp.allclose(loss_r, ref_r, atol=1e-5, rtol=1e-5), (loss_r, ref_r)

    print("KERNEL_OK")
</pallas_src>

<mosaic_0001>
module attributes {stable_mosaic.version = 11 : i64} {
  func.func @_rmse_partial_kernel(%arg0: i32, %arg1: i32, %arg2: memref<16x128xf32, #tpu.memory_space<vmem>>, %arg3: memref<16x128xf32, #tpu.memory_space<vmem>>, %arg4: memref<1x8x128xf32, #tpu.memory_space<vmem>>) attributes {dimension_semantics = [#tpu.dimension_semantics<parallel>, #tpu.dimension_semantics<arbitrary>], iteration_bounds = array<i64: 1, 1>, scalar_prefetch = 0 : i64, scratch_operands = 0 : i64, tpu.core_type = #tpu.core_type<tc>, window_params = [{transform_indices = @transform_0, window_bounds = array<i64: 16, 128>}, {transform_indices = @transform_1, window_bounds = array<i64: 16, 128>}, {transform_indices = @transform_2, window_bounds = array<i64: 1, 8, 128>}]} {
    %c0_i32 = arith.constant 0 : i32
    %0 = arith.cmpi eq, %arg1, %c0_i32 : i32
    %1 = arith.extui %0 : i1 to i32
    %c0_i32_0 = arith.constant 0 : i32
    %2 = arith.cmpi ne, %1, %c0_i32_0 : i32
    scf.if %2 {
      %cst = arith.constant 0.000000e+00 : f32
      %13 = vector.broadcast %cst : f32 to vector<1x8x128xf32>
      %c0 = arith.constant 0 : index
      %c0_5 = arith.constant 0 : index
      %c0_6 = arith.constant 0 : index
      %14 = vector.load %arg4[%c0, %c0_5, %c0_6] : memref<1x8x128xf32, #tpu.memory_space<vmem>>, vector<1x8x128xf32>
      tpu.vector_store %arg4[%c0, %c0_5, %c0_6], %13 {strides = array<i32>} : memref<1x8x128xf32, #tpu.memory_space<vmem>>, vector<1x8x128xf32>,
    } else {
    }
    %c1_i32 = arith.constant 1 : i32
    %3 = arith.muli %arg0, %c1_i32 : i32
    %4 = arith.addi %3, %arg1 : i32
    %c16_i32 = arith.constant 16 : i32
    %5 = arith.muli %4, %c16_i32 : i32
    %c16_i32_1 = arith.constant 16 : i32
    %6 = arith.subi %c16_i32_1, %5 : i32
    %c16_i32_2 = arith.constant 16 : i32
    %7 = arith.cmpi slt, %6, %c16_i32_2 : i32
    %true = arith.constant true
    %8 = arith.xori %7, %true : i1
    %9 = arith.extui %8 : i1 to i32
    %c0_i32_3 = arith.constant 0 : i32
    %10 = arith.cmpi ne, %9, %c0_i32_3 : i32
    scf.if %10 {
      %c0 = arith.constant 0 : index
      %c0_5 = arith.constant 0 : index
      %13 = vector.load %arg2[%c0, %c0_5] : memref<16x128xf32, #tpu.memory_space<vmem>>, vector<16x128xf32>
      %c0_6 = arith.constant 0 : index
      %c0_7 = arith.constant 0 : index
      %14 = vector.load %arg3[%c0_6, %c0_7] : memref<16x128xf32, #tpu.memory_space<vmem>>, vector<16x128xf32>
      %15 = arith.subf %13, %14 : vector<16x128xf32>
      %16 = arith.mulf %15, %15 : vector<16x128xf32>
      %17 = vector.shape_cast %16 : vector<16x128xf32> to vector<2x8x128xf32>
      %cst = arith.constant dense<0.000000e+00> : vector<8x128xf32>
      %18 = vector.multi_reduction <add>, %17, %cst [0] : vector<2x8x128xf32> to vector<8x128xf32>
      %c0_8 = arith.constant 0 : index
      %c0_9 = arith.constant 0 : index
      %c0_10 = arith.constant 0 : index
      %19 = vector.load %arg4[%c0_8, %c0_9, %c0_10] : memref<1x8x128xf32, #tpu.memory_space<vmem>>, vector<1x8x128xf32>
      %20 = vector.shape_cast %18 : vector<8x128xf32> to vector<1x8x128xf32>
      %21 = arith.addf %19, %20 : vector<1x8x128xf32>
      %c0_11 = arith.constant 0 : index
      %c0_12 = arith.constant 0 : index
      %c0_13 = arith.constant 0 : index
      %22 = vector.load %arg4[%c0_11, %c0_12, %c0_13] : memref<1x8x128xf32, #tpu.memory_space<vmem>>, vector<1x8x128xf32>
      tpu.vector_store %arg4[%c0_11, %c0_12, %c0_13], %21 {strides = array<i32>} : memref<1x8x128xf32, #tpu.memory_space<vmem>>, vector<1x8x128xf32>,
    } else {
    }
    %11 = arith.extui %7 : i1 to i32
    %c0_i32_4 = arith.constant 0 : i32
    %12 = arith.cmpi ne, %11, %c0_i32_4 : i32
    scf.if %12 {
      %c0 = arith.constant 0 : index
      %c0_5 = arith.constant 0 : index
      %13 = vector.load %arg2[%c0, %c0_5] : memref<16x128xf32, #tpu.memory_space<vmem>>, vector<16x128xf32>
      %c0_6 = arith.constant 0 : index
      %c0_7 = arith.constant 0 : index
      %14 = vector.load %arg3[%c0_6, %c0_7] : memref<16x128xf32, #tpu.memory_space<vmem>>, vector<16x128xf32>
      %15 = arith.subf %13, %14 : vector<16x128xf32>
      %16 = tpu.iota {dimensions = array<i32: 0>} : vector<16x128xi32>
      %17 = vector.broadcast %6 : i32 to vector<16x128xi32>
      %18 = arith.cmpi slt, %16, %17 : vector<16x128xi32>
      %19 = arith.mulf %15, %15 : vector<16x128xf32>
      %cst = arith.constant 0.000000e+00 : f32
      %20 = vector.broadcast %cst : f32 to vector<16x128xf32>
      %21 = arith.select %18, %19, %20 : vector<16x128xi1>, vector<16x128xf32>
      %22 = vector.shape_cast %21 : vector<16x128xf32> to vector<2x8x128xf32>
      %cst_8 = arith.constant dense<0.000000e+00> : vector<8x128xf32>
      %23 = vector.multi_reduction <add>, %22, %cst_8 [0] : vector<2x8x128xf32> to vector<8x128xf32>
      %c0_9 = arith.constant 0 : index
      %c0_10 = arith.constant 0 : index
      %c0_11 = arith.constant 0 : index
      %24 = vector.load %arg4[%c0_9, %c0_10, %c0_11] : memref<1x8x128xf32, #tpu.memory_space<vmem>>, vector<1x8x128xf32>
      %25 = vector.shape_cast %23 : vector<8x128xf32> to vector<1x8x128xf32>
      %26 = arith.addf %24, %25 : vector<1x8x128xf32>
      %c0_12 = arith.constant 0 : index
      %c0_13 = arith.constant 0 : index
      %c0_14 = arith.constant 0 : index
      %27 = vector.load %arg4[%c0_12, %c0_13, %c0_14] : memref<1x8x128xf32, #tpu.memory_space<vmem>>, vector<1x8x128xf32>
      tpu.vector_store %arg4[%c0_12, %c0_13, %c0_14], %26 {strides = array<i32>} : memref<1x8x128xf32, #tpu.memory_space<vmem>>, vector<1x8x128xf32>,
    } else {
    }
    return
  }
  func.func @transform_0(%arg0: i32, %arg1: i32) -> (i32, i32) {
    %c1_i32 = arith.constant 1 : i32
    %0 = arith.muli %arg0, %c1_i32 : i32
    %1 = arith.addi %0, %arg1 : i32
    %c0_i32 = arith.constant 0 : i32
    %2 = arith.minsi %1, %c0_i32 : i32
    %c0_i32_0 = arith.constant 0 : i32
    %c0_i32_1 = arith.constant 0 : i32
    return %2, %c0_i32_0 : i32, i32
  }
  func.func @transform_1(%arg0: i32, %arg1: i32) -> (i32, i32) {
    %c1_i32 = arith.constant 1 : i32
    %0 = arith.muli %arg0, %c1_i32 : i32
    %1 = arith.addi %0, %arg1 : i32
    %c0_i32 = arith.constant 0 : i32
    %2 = arith.minsi %1, %c0_i32 : i32
    %c0_i32_0 = arith.constant 0 : i32
    %c0_i32_1 = arith.constant 0 : i32
    return %2, %c0_i32_0 : i32, i32
  }
  func.func @transform_2(%arg0: i32, %arg1: i32) -> (i32, i32, i32) {
    %c0_i32 = arith.constant 0 : i32
    %c0_i32_0 = arith.constant 0 : i32
    %c0_i32_1 = arith.constant 0 : i32
    return %arg0, %c0_i32, %c0_i32_0 : i32, i32, i32
  }
}

</mosaic_0001>

<llo_original>
// kernel: tpu_custom_call.1
$region0: #{tpu_custom_call.1}
  #allocation0 [shape = 'u32[]', space=smem, size = 0x4, offset = 0x4, fixed_abs, tag = 'smem constant byte address 0x4 - core index']
  #allocation1 [shape = 'u32[144,128]{1,0:T(1,128)}', space=vmem, size = 0x12000, scoped, tag = 'internal scratch']
  %s0 = inlined_call_operand.hbm [shape: f32[16,128], index: 0, kind: input, shape index: {}]
  %s1 = inlined_call_operand.hbm [shape: f32[16,128], index: 1, kind: input, shape index: {}]
  %s2 = inlined_call_operand.hbm [shape: f32[1,8,128], index: 2, kind: output, shape index: {}]
  %s3 = sld [smem:[#allocation0]]
  $region38: #{tpu_custom_call.1} parent=0
    _
  %s5 = ssub.s32 1, %s3
  %s6 = scalar_select 0, %s5, %s3
  $region1: #{tpu_custom_call.1} parent=0
    #allocation2 [shape = 'u8[8192]{0}', space=vmem, size = 0x2000, scoped, tag = 'input window, operand 0, single buffered']
    #allocation3 [shape = 's32[1]{0}', space=sflag, size = 0x4, scoped, tag = 'scoped memory for tpu_custom_call.1']
    #allocation4 [shape = 's32[1]{0}', space=sflag, size = 0x4, scoped, tag = 'scoped memory for tpu_custom_call.1']
    #allocation5 [shape = 'u8[8192]{0}', space=vmem, size = 0x2000, scoped, tag = 'input window, operand 1, single buffered']
    #allocation6 [shape = 's32[1]{0}', space=sflag, size = 0x4, scoped, tag = 'scoped memory for tpu_custom_call.1']
    #allocation7 [shape = 'u8[4096]{0}', space=vmem, size = 0x1000, scoped, tag = 'output window, operand 0, single buffered']
    %7 = vsyncpa [#allocation3], 0
    %8 = vsyncpa [#allocation6], 0
    %9 = vsyncpa [#allocation4], 0
    // Predicated region
    $region2: #{tpu_custom_call.1} parent=1 // pred_check
      _
    $region3: #{tpu_custom_call.1} parent=1 // pred_check_branch
      %11 = sbr.rel (0) target = $region5
    $region4: #{tpu_custom_call.1} parent=1 // pred_region
      %s12 = sadd.s32 0, 0
      %p13 = scmp.lt.s32.totalorder %s12, 0
      %s14 = scalar_select %p13, %s12, 0
      %s15 = smul.u32 2, %s14
      %s17 = ssub.s32 256, 256
      %18 = vsyncadd [#allocation3], %s17
      %s19 = smul.addr %s15, 128
      %s20 = scalar_lea.hbm %s0, %s19
      %s21 = sshll.u32 [#allocation2], 4
      %s22 = int_to_ptr.vmem [resolvable:$true] %s21
      %27 = dma.hbm_to_vmem [thread:$0]  %s20, 256, %s22, [#allocation3], 128, 128, 8
    $region5: #{tpu_custom_call.1} parent=1 // pred_fallthru
      _
    // Predicated region
    $region6: #{tpu_custom_call.1} parent=1 // pred_check
      _
    $region7: #{tpu_custom_call.1} parent=1 // pred_check_branch
      %29 = sbr.rel (0) target = $region9
    $region8: #{tpu_custom_call.1} parent=1 // pred_region
      %s30 = sadd.s32 0, 0
      %p31 = scmp.lt.s32.totalorder %s30, 0
      %s32 = scalar_select %p31, %s30, 0
      %s33 = smul.u32 2, %s32
      %s35 = ssub.s32 256, 256
      %36 = vsyncadd [#allocation6], %s35
      %s37 = smul.addr %s33, 128
      %s38 = scalar_lea.hbm %s1, %s37
      %s39 = sshll.u32 [#allocation5], 4
      %s40 = int_to_ptr.vmem [resolvable:$true] %s39
      %45 = dma.hbm_to_vmem [thread:$0]  %s38, 256, %s40, [#allocation6], 128, 128, 8
    $region9: #{tpu_custom_call.1} parent=1 // pred_fallthru
      _
    // Predicated region
    $region10: #{tpu_custom_call.1} parent=1 // pred_check
      _
    $region11: #{tpu_custom_call.1} parent=1 // pred_check_branch
      %47 = sbr.rel (0) target = $region13
    $region12: #{tpu_custom_call.1} parent=1 // pred_region
      %48 = dma.done [#allocation3], 256
    $region13: #{tpu_custom_call.1} parent=1 // pred_fallthru
      _
    // Predicated region
    $region14: #{tpu_custom_call.1} parent=1 // pred_check
      _
    $region15: #{tpu_custom_call.1} parent=1 // pred_check_branch
      %50 = sbr.rel (0) target = $region17
    $region16: #{tpu_custom_call.1} parent=1 // pred_region
      %51 = dma.done [#allocation6], 256
    $region17: #{tpu_custom_call.1} parent=1 // pred_fallthru
      _
    %s52 = sadd.s32 0, 0
    %p53 = scmp.lt.s32.totalorder %s52, 0
    %s54 = scalar_select %p53, %s52, 0
    %s55 = smul.u32 2, %s54
    %s56 = sadd.s32 0, 0
    %p57 = scmp.lt.s32.totalorder %s56, 0
    %s58 = scalar_select %p57, %s56, 0
    %s59 = smul.u32 2, %s58
    %p60 = scmp.eq.s32.totalorder 0, 0
    // Predicated region
    $region18: #{tpu_custom_call.1} parent=1 // pred_check
      %p61 = pneg %p60
    $region19: #{tpu_custom_call.1} parent=1 // pred_check_branch
      %63 = sbr.rel (%p61) target = $region21
    $region20: #{tpu_custom_call.1} parent=1 // pred_region
      %64 = vst [vmem:[#allocation7] sm:$0xff] 0.0
    $region21: #{tpu_custom_call.1} parent=1 // pred_fallthru
      _
    %s65 = sadd.s32 0, 0
    %s66 = smul.u32 %s65, 16
    %s67 = ssub.s32 16, %s66
    %p68 = scmp.lt.s32.totalorder %s67, 16
    %p69 = scmp.ge.s32.totalorder %s67, 16
    // Predicated region
    $region22: #{tpu_custom_call.1} parent=1 // pred_check
      %p70 = pneg %p69
    $region23: #{tpu_custom_call.1} parent=1 // pred_check_branch
      %72 = sbr.rel (%p70) target = $region25
    $region24: #{tpu_custom_call.1} parent=1 // pred_region
      %v73 = vld [vmem:[#allocation2] sm:$0xff]
      %v74 = vld [vmem:[#allocation2 + $0x8] sm:$0xff]
      %v75 = vld [vmem:[#allocation5] sm:$0xff]
      %v76 = vld [vmem:[#allocation5 + $0x8] sm:$0xff]
      %v77 = vsub.f32 %v73, %v75
      %v78 = vsub.f32 %v74, %v76
      %v79 = vmul.f32 %v77, %v77
      %v80 = vmul.f32 %v78, %v78
      %v81 = vadd.f32 %v79, %v80
      %v82 = vld [vmem:[#allocation7] sm:$0xff]
      %v83 = vadd.f32 %v82, %v81
      %84 = vst [vmem:[#allocation7] sm:$0xff] %v83
    $region25: #{tpu_custom_call.1} parent=1 // pred_fallthru
      _
    // Predicated region
    $region26: #{tpu_custom_call.1} parent=1 // pred_check
      %p85 = pneg %p68
    $region27: #{tpu_custom_call.1} parent=1 // pred_check_branch
      %87 = sbr.rel (%p85) target = $region29
    $region28: #{tpu_custom_call.1} parent=1 // pred_region
      %v88 = vld [vmem:[#allocation2] sm:$0xff]
      %v89 = vld [vmem:[#allocation2 + $0x8] sm:$0xff]
      %v90 = vld [vmem:[#allocation5] sm:$0xff]
      %v91 = vld [vmem:[#allocation5 + $0x8] sm:$0xff]
      %v92 = vsub.f32 %v88, %v90
      %v93 = vsub.f32 %v89, %v91
      %v94 = vlaneseq
      %v95 = vshrl.u32 %v94, 7
      %v96 = vadd.s32 %v95, 8
      %v97 = vstv %s67
      %vm98 = vcmp.lt.s32.totalorder %v95, %v97
      %vm99 = vcmp.lt.s32.totalorder %v96, %v97
      %v100 = vmul.f32 %v92, %v92
      %v101 = vmul.f32 %v93, %v93
      %v102 = vsel %vm98, %v100, 0.0
      %v103 = vsel %vm99, %v101, 0.0
      %v104 = vadd.f32 %v102, %v103
      %v105 = vld [vmem:[#allocation7] sm:$0xff]
      %v106 = vadd.f32 %v105, %v104
      %107 = vst [vmem:[#allocation7] sm:$0xff] %v106
    $region29: #{tpu_custom_call.1} parent=1 // pred_fallthru
      _
    // Predicated region
    $region30: #{tpu_custom_call.1} parent=1 // pred_check
      _
    $region31: #{tpu_custom_call.1} parent=1 // pred_check_branch
      %109 = sbr.rel (0) target = $region33
    $region32: #{tpu_custom_call.1} parent=1 // pred_region
      %s111 = ssub.s32 128, 128
      %112 = vsyncadd [#allocation4], %s111
      %s114 = sshll.u32 [#allocation7], 4
      %s115 = int_to_ptr.vmem [resolvable:$true] %s114
      %117 = dma.vmem_to_hbm [thread:$0]  %s115, 128, %s2, [#allocation4]
    $region33: #{tpu_custom_call.1} parent=1 // pred_fallthru
      _
    // Predicated region
    $region34: #{tpu_custom_call.1} parent=1 // pred_check
      _
    $region35: #{tpu_custom_call.1} parent=1 // pred_check_branch
      %119 = sbr.rel (0) target = $region37
    $region36: #{tpu_custom_call.1} parent=1 // pred_region
      %120 = dma.done [#allocation4], 128
    $region37: #{tpu_custom_call.1} parent=1 // pred_fallthru
      _
    %121 = vsyncpa [#allocation3], 1
    %122 = vsyncpa [#allocation6], 1
    %123 = vsyncpa [#allocation4], 1

</llo_original>
